<compile_context>
chip_gen: v7x
topology: tpu7x:2x2x1
jax: 0.10.0
libtpu: 0.0.40
codegen_flags: <defaults>
</compile_context>

<pallas_src>
import functools
import math

import jax
import jax.numpy as jnp
import numpy as np
from jax.experimental import pallas as pl
from jax.experimental.pallas import tpu as pltpu


# ------------------------------ tiling helpers ------------------------------

def _row_tile(dim, target):
    """Tile for a non-reduction axis; partial tails handled by output masking."""
    return dim if dim <= target else target


def _red_tile(dim, target):
    """Tile for a reduction axis: must evenly divide `dim` (OOB padding must not leak
    into accumulations). Prefer 128-aligned (lane-dense), then 8-aligned."""
    if dim <= target:
        return dim
    for align in (128, 8):
        t = (target // align) * align
        while t >= align:
            if dim % t == 0:
                return t
            t -= align
    # TODO(synk): pad awkward reduction dims instead of falling back to the full dim.
    return dim


def _compiler_params(semantics, vmem_bytes=None):
    kwargs = dict(dimension_semantics=semantics)
    if vmem_bytes is not None:
        kwargs["vmem_limit_bytes"] = int(min(max(2 * vmem_bytes, 32 << 20), 64 << 20))
    return pltpu.CompilerParams(**kwargs)


# ----------------------- kernel 1: tiled matmul + bias -----------------------

def _matmul_bias_kernel(x_ref, w_ref, b_ref, o_ref, acc_ref, *, activation, out_scale):
    @pl.when(pl.program_id(2) == 0)
    def _():
        acc_ref[...] = jnp.zeros_like(acc_ref)

    acc_ref[...] += jnp.dot(x_ref[...], w_ref[...],
                            preferred_element_type=jnp.float32)

    @pl.when(pl.program_id(2) == pl.num_programs(2) - 1)
    def _():
        y = acc_ref[...] + b_ref[...].astype(jnp.float32)
        if out_scale is not None:
            y = y * out_scale
        if activation == "relu":
            y = jnp.maximum(y, 0.0)
        o_ref[...] = y.astype(o_ref.dtype)


def pallas_linear(x, w, b, activation=None, out_scale=None, tm=256, tn=256, tk=512):
    """y = (x @ w + b) [* out_scale] [relu] over the last axis of x."""
    lead = x.shape[:-1]
    K = x.shape[-1]
    N = w.shape[-1]
    M = int(np.prod(lead)) if lead else 1
    tm = _row_tile(M, tm)
    tn = _row_tile(N, tn)
    tk = _red_tile(K, tk)
    grid = (pl.cdiv(M, tm), pl.cdiv(N, tn), K // tk)
    itemsize = x.dtype.itemsize
    out = pl.pallas_call(
        functools.partial(_matmul_bias_kernel, activation=activation,
                          out_scale=out_scale),
        out_shape=jax.ShapeDtypeStruct((M, N), x.dtype),
        grid=grid,
        in_specs=[
            pl.BlockSpec((tm, tk), lambda i, j, k: (i, k)),
            pl.BlockSpec((tk, tn), lambda i, j, k: (k, j)),
            pl.BlockSpec((1, tn), lambda i, j, k: (0, j)),
        ],
        out_specs=pl.BlockSpec((tm, tn), lambda i, j, k: (i, j)),
        scratch_shapes=[pltpu.VMEM((tm, tn), jnp.float32)],
        compiler_params=_compiler_params(("parallel", "parallel", "arbitrary")),
        cost_estimate=pl.CostEstimate(
            flops=2 * M * N * K, transcendentals=0,
            bytes_accessed=(M * K + K * N + N + M * N) * itemsize),
    )(x.reshape(M, K), w, b.reshape(1, N))
    return out.reshape(lead + (N,))


# ------------- kernel 2: fused QKV projection + RoPE (self-attention) -------------

def _qkv_rope_kernel(x_ref, w_ref, b_ref, emb_ref, o_ref, acc_ref, *,
                     num_heads, head_dim, scale):
    @pl.when(pl.program_id(1) == 0)
    def _():
        acc_ref[...] = jnp.zeros_like(acc_ref)

    acc_ref[...] += jnp.dot(x_ref[...], w_ref[...],
                            preferred_element_type=jnp.float32)

    @pl.when(pl.program_id(1) == pl.num_programs(1) - 1)
    def _():
        C = num_heads * head_dim
        half = head_dim // 2
        y = acc_ref[...] + b_ref[...].astype(jnp.float32)        # (tm, 3C)
        theta = emb_ref[...].astype(jnp.float32)                  # (tm, C)
        cos = jnp.cos(theta)
        sin = jnp.sin(theta)
        q = y[:, :C]
        k = y[:, C:2 * C]
        v = y[:, 2 * C:]

        # GeoTransformer rotate-half with learnable angles; applied ONCE here
        # (pre-pass), never inside the KV loop of the attention kernel.
        def rotate_half(z):
            parts = []
            for h in range(num_heads):
                zh = z[:, h * head_dim:(h + 1) * head_dim]
                parts.append(jnp.concatenate([-zh[:, half:], zh[:, :half]], axis=-1))
            return jnp.concatenate(parts, axis=-1)

        q_out = (q * cos + rotate_half(q) * sin) * scale           # fold 1/sqrt(Dh) into q
        k_out = k * cos + rotate_half(k) * sin
        o_ref[...] = jnp.concatenate([q_out, k_out, v], axis=-1).astype(o_ref.dtype)


def pallas_qkv_rope(x, wqkv, bqkv, emb, num_heads, scale, tm=256, tk=512):
    """Packed rotated QKV: q/k get rotate-half RoPE with per-point angles `emb`
    (shape (..., C)); 1/sqrt(Dh) is folded into q. Output (..., 3C)."""
    lead = x.shape[:-1]
    K = x.shape[-1]
    N = wqkv.shape[-1]                       # 3C
    C = N // 3
    head_dim = C // num_heads
    M = int(np.prod(lead)) if lead else 1
    tm = _row_tile(M, tm)
    tk = _red_tile(K, tk)
    grid = (pl.cdiv(M, tm), K // tk)
    itemsize = x.dtype.itemsize
    out = pl.pallas_call(
        functools.partial(_qkv_rope_kernel, num_heads=num_heads,
                          head_dim=head_dim, scale=scale),
        out_shape=jax.ShapeDtypeStruct((M, N), x.dtype),
        grid=grid,
        in_specs=[
            pl.BlockSpec((tm, tk), lambda i, k: (i, k)),
            pl.BlockSpec((tk, N), lambda i, k: (k, 0)),
            pl.BlockSpec((1, N), lambda i, k: (0, 0)),
            pl.BlockSpec((tm, C), lambda i, k: (i, 0)),
        ],
        out_specs=pl.BlockSpec((tm, N), lambda i, k: (i, 0)),
        scratch_shapes=[pltpu.VMEM((tm, N), jnp.float32)],
        compiler_params=_compiler_params(
            ("parallel", "arbitrary"),
            vmem_bytes=(K * N + N + tm * (K + 2 * N + C)) * itemsize),
        cost_estimate=pl.CostEstimate(
            flops=2 * M * N * K + 12 * M * C,
            transcendentals=2 * M * C,
            bytes_accessed=(M * K + K * N + N + M * C + M * N) * itemsize),
    )(x.reshape(M, K), wqkv, bqkv.reshape(1, N), emb.reshape(M, C))
    return out.reshape(lead + (N,))


# ----------------- kernel 3: fused linear + residual + LayerNorm -----------------

def _linear_res_ln_kernel(x_ref, w_ref, b_ref, r_ref, g_ref, bt_ref, o_ref, *, eps):
    y = jnp.dot(x_ref[...], w_ref[...], preferred_element_type=jnp.float32)
    y = y + b_ref[...].astype(jnp.float32) + r_ref[...].astype(jnp.float32)
    mean = jnp.mean(y, axis=-1, keepdims=True)
    var = jnp.mean((y - mean) ** 2, axis=-1, keepdims=True)
    yn = (y - mean) * jax.lax.rsqrt(var + eps)
    o_ref[...] = (yn * g_ref[...].astype(jnp.float32)
                  + bt_ref[...].astype(jnp.float32)).astype(o_ref.dtype)


def pallas_linear_residual_ln(x, w, b, residual, gamma, beta, eps=1e-5, tm=256):
    """LayerNorm(x @ w + b + residual) — out-proj + residual-add + LN fused."""
    lead = x.shape[:-1]
    K = x.shape[-1]
    N = w.shape[-1]
    M = int(np.prod(lead)) if lead else 1
    tm = _row_tile(M, tm)
    itemsize = x.dtype.itemsize
    vmem_bytes = (K * N + 3 * N + 2 * tm * (K + 2 * N)) * itemsize
    out = pl.pallas_call(
        functools.partial(_linear_res_ln_kernel, eps=eps),
        out_shape=jax.ShapeDtypeStruct((M, N), x.dtype),
        grid=(pl.cdiv(M, tm),),
        in_specs=[
            pl.BlockSpec((tm, K), lambda i: (i, 0)),
            pl.BlockSpec((K, N), lambda i: (0, 0)),
            pl.BlockSpec((1, N), lambda i: (0, 0)),
            pl.BlockSpec((tm, N), lambda i: (i, 0)),
            pl.BlockSpec((1, N), lambda i: (0, 0)),
            pl.BlockSpec((1, N), lambda i: (0, 0)),
        ],
        out_specs=pl.BlockSpec((tm, N), lambda i: (i, 0)),
        compiler_params=_compiler_params(("parallel",), vmem_bytes=vmem_bytes),
        cost_estimate=pl.CostEstimate(
            flops=2 * M * N * K + 10 * M * N, transcendentals=M,
            bytes_accessed=(M * K + K * N + 2 * M * N + 3 * N) * itemsize),
    )(x.reshape(M, K), w, b.reshape(1, N),
      residual.reshape(M, N), gamma.reshape(1, N), beta.reshape(1, N))
    return out.reshape(lead + (N,))


# -------------------- kernel 4: fused FFN + residual + LayerNorm --------------------

def _ffn_ln_kernel(x_ref, we_ref, be_ref, ws_ref, bs_ref, g_ref, bt_ref, o_ref, *, eps):
    x = x_ref[...]
    h = jnp.dot(x, we_ref[...], preferred_element_type=jnp.float32)
    h = jnp.maximum(h + be_ref[...].astype(jnp.float32), 0.0)
    y = jnp.dot(h.astype(x.dtype), ws_ref[...], preferred_element_type=jnp.float32)
    y = y + bs_ref[...].astype(jnp.float32) + x.astype(jnp.float32)
    mean = jnp.mean(y, axis=-1, keepdims=True)
    var = jnp.mean((y - mean) ** 2, axis=-1, keepdims=True)
    yn = (y - mean) * jax.lax.rsqrt(var + eps)
    o_ref[...] = (yn * g_ref[...].astype(jnp.float32)
                  + bt_ref[...].astype(jnp.float32)).astype(o_ref.dtype)


def pallas_ffn_ln(x, we, be, ws, bs, gamma, beta, eps=1e-5, tm=256):
    """LayerNorm(relu(x @ we + be) @ ws + bs + x) — whole FFN + residual + LN fused."""
    lead = x.shape[:-1]
    C = x.shape[-1]
    E = we.shape[-1]
    M = int(np.prod(lead)) if lead else 1
    tm = _row_tile(M, tm)
    itemsize = x.dtype.itemsize
    vmem_bytes = (2 * C * E + E + 3 * C + 2 * tm * 2 * C + tm * E) * itemsize
    out = pl.pallas_call(
        functools.partial(_ffn_ln_kernel, eps=eps),
        out_shape=jax.ShapeDtypeStruct((M, C), x.dtype),
        grid=(pl.cdiv(M, tm),),
        in_specs=[
            pl.BlockSpec((tm, C), lambda i: (i, 0)),
            pl.BlockSpec((C, E), lambda i: (0, 0)),
            pl.BlockSpec((1, E), lambda i: (0, 0)),
            pl.BlockSpec((E, C), lambda i: (0, 0)),
            pl.BlockSpec((1, C), lambda i: (0, 0)),
            pl.BlockSpec((1, C), lambda i: (0, 0)),
            pl.BlockSpec((1, C), lambda i: (0, 0)),
        ],
        out_specs=pl.BlockSpec((tm, C), lambda i: (i, 0)),
        compiler_params=_compiler_params(("parallel",), vmem_bytes=vmem_bytes),
        cost_estimate=pl.CostEstimate(
            flops=4 * M * C * E + 12 * M * C, transcendentals=M,
            bytes_accessed=(2 * M * C + 2 * C * E + E + 3 * C) * itemsize),
    )(x.reshape(M, C), we, be.reshape(1, E), ws, bs.reshape(1, C),
      gamma.reshape(1, C), beta.reshape(1, C))
    return out.reshape(lead + (C,))


# ------------- kernel 5: flash-style MHA (RoPE + scale already applied) -------------

def _flash_mha_kernel(q_ref, k_ref, v_ref, o_ref, m_ref, l_ref, acc_ref, *,
                      num_heads, head_dim, dot_dtype):
    @pl.when(pl.program_id(2) == 0)
    def _():
        m_ref[...] = jnp.full(m_ref.shape, -jnp.inf, dtype=m_ref.dtype)
        l_ref[...] = jnp.zeros_like(l_ref)
        acc_ref[...] = jnp.zeros_like(acc_ref)

    # Heads are static lane-slices of the packed (tq, C)/(tkv, C) tiles.
    for h in range(num_heads):
        sl = slice(h * head_dim, (h + 1) * head_dim)
        qh = q_ref[:, sl].astype(dot_dtype)      # pre-rotated + pre-scaled upstream
        kh = k_ref[:, sl].astype(dot_dtype)
        # NT matmul (contract last dims of both) — no explicit K transpose.
        s = jax.lax.dot_general(qh, kh, (((1,), (1,)), ((), ())),
                                preferred_element_type=jnp.float32)   # (tq, tkv)

        m_prev = m_ref[:, h:h + 1]                                    # (tq, 1)
        l_prev = l_ref[:, h:h + 1]
        m_new = jnp.maximum(m_prev, jnp.max(s, axis=-1, keepdims=True))
        alpha = jnp.exp(m_prev - m_new)                               # (tq, 1) register
        p = jnp.exp(s - m_new)                                        # (tq, tkv)
        l_ref[:, h:h + 1] = alpha * l_prev + jnp.sum(p, axis=-1, keepdims=True)
        m_ref[:, h:h + 1] = m_new
        pv = jnp.dot(p.astype(dot_dtype), v_ref[:, sl].astype(dot_dtype),
                     preferred_element_type=jnp.float32)              # (tq, Dh)
        acc_ref[:, sl] = alpha * acc_ref[:, sl] + pv

    @pl.when(pl.program_id(2) == pl.num_programs(2) - 1)
    def _():
        parts = []
        for h in range(num_heads):
            inv_l = pl.reciprocal(l_ref[:, h:h + 1], approx=True)      # EUP slot
            parts.append(acc_ref[:, h * head_dim:(h + 1) * head_dim] * inv_l)
        o_ref[...] = jnp.concatenate(parts, axis=-1).astype(o_ref.dtype)


def pallas_attention(q_part, k_part, v_part, num_heads, channels,
                     tq_target=256, tkv_target=256):
    """Multi-head attention, flash-style over KV tiles.

    Each of q_part/k_part/v_part is (array, last_dim_block_index): the array's last
    dim is partitioned into blocks of `channels` and the given block index is the
    one consumed (lets packed QKV / KV buffers be read directly, no jnp.split).
    Q must already be RoPE'd (if applicable) and scaled by 1/sqrt(Dh).
    """
    q_arr, q_blk = q_part
    k_arr, k_blk = k_part
    v_arr, v_blk = v_part
    B, Nq = q_arr.shape[0], q_arr.shape[1]
    Nk = k_arr.shape[1]
    C = channels
    assert C % num_heads == 0 and num_heads <= 128
    head_dim = C // num_heads
    dot_dtype = q_arr.dtype

    tq = _row_tile(Nq, tq_target)
    tkv = _red_tile(Nk, tkv_target)          # online-softmax reduction axis; 128-aligned pref
    grid = (B, pl.cdiv(Nq, tq), Nk // tkv)

    in_specs = [
        pl.BlockSpec((None, tq, C), lambda b, qi, ki, blk=q_blk: (b, qi, blk)),
        pl.BlockSpec((None, tkv, C), lambda b, qi, ki, blk=k_blk: (b, ki, blk)),
        pl.BlockSpec((None, tkv, C), lambda b, qi, ki, blk=v_blk: (b, ki, blk)),
    ]

    itemsize = q_arr.dtype.itemsize
    nbytes = B * (2 * Nq * C + pl.cdiv(Nq, tq) * Nk * 2 * C) * itemsize

    kernel = functools.partial(_flash_mha_kernel, num_heads=num_heads,
                               head_dim=head_dim, dot_dtype=dot_dtype)
    return pl.pallas_call(
        kernel,
        out_shape=jax.ShapeDtypeStruct((B, Nq, C), q_arr.dtype),
        grid=grid,
        in_specs=in_specs,
        out_specs=pl.BlockSpec((None, tq, C), lambda b, qi, ki: (b, qi, 0)),
        scratch_shapes=[pltpu.VMEM((tq, 128), jnp.float32),   # running max: 1 lane / head
                        pltpu.VMEM((tq, 128), jnp.float32),   # running sum: 1 lane / head
                        pltpu.VMEM((tq, C), jnp.float32)],    # un-normalized accumulator
        compiler_params=_compiler_params(("parallel", "parallel", "arbitrary")),
        cost_estimate=pl.CostEstimate(
            flops=4 * B * Nq * Nk * C,
            transcendentals=B * num_heads * Nq * Nk,
            bytes_accessed=nbytes),
    )(q_arr, k_arr, v_arr)


def _attn_parts_from_packed(packed, C, n_parts):
    """Consume a packed (..., n_parts*C) buffer directly via BlockSpec last-dim block
    indices when C is lane-aligned; otherwise fall back to splitting outside."""
    if C % 128 == 0:
        return [(packed, i) for i in range(n_parts)]
    chunks = jnp.split(packed, n_parts, axis=-1)
    return [(c, 0) for c in chunks]


# --------------------------- Pallas forward (model glue) ---------------------------

def _pallas_self_block(x, p, emb, num_heads):
    B, N, C = x.shape
    scale = 1.0 / math.sqrt(C // num_heads)
    qkv = pallas_qkv_rope(x, p["wqkv"], p["bqkv"], emb, num_heads, scale)
    q_part, k_part, v_part = _attn_parts_from_packed(qkv, C, 3)
    o = pallas_attention(q_part, k_part, v_part, num_heads, C)
    x = pallas_linear_residual_ln(o, p["wo"], p["bo"], x, p["ln1_g"], p["ln1_b"])
    x = pallas_ffn_ln(x, p["we"], p["be"], p["ws"], p["bs"], p["ln2_g"], p["ln2_b"])
    return x


def _pallas_cross_block(x, mem, p, num_heads):
    B, Nq, C = x.shape
    scale = 1.0 / math.sqrt(C // num_heads)
    q = pallas_linear(x, p["wq"], p["bq"], out_scale=scale)     # scale folded in epilogue
    kv = pallas_linear(mem, p["wkv"], p["bkv"])                  # packed (.., 2C)
    k_part, v_part = _attn_parts_from_packed(kv, C, 2)
    o = pallas_attention((q, 0), k_part, v_part, num_heads, C)
    x = pallas_linear_residual_ln(o, p["wo"], p["bo"], x, p["ln1_g"], p["ln1_b"])
    x = pallas_ffn_ln(x, p["we"], p["be"], p["ws"], p["bs"], p["ln2_g"], p["ln2_b"])
    return x


def thdroformer_forward(params, ref_points, src_points, ref_feats, src_feats,
                        ref_masks=None, src_masks=None, return_pos_emb=False,
                        compute_dtype=jnp.float32):
    # TODO(synk): ref_masks / src_masks (key padding) not wired into the attention kernel.
    def cast(t):
        if hasattr(t, "dtype") and jnp.issubdtype(t.dtype, jnp.floating):
            return t.astype(compute_dtype)
        return t

    params = jax.tree_util.tree_map(cast, params)
    ref_points, src_points = cast(ref_points), cast(src_points)
    ref_feats, src_feats = cast(ref_feats), cast(src_feats)
    num_heads = params["num_heads"]

    # Tiny projections (K=3 / K=input_dim) are MXU-hostile and bandwidth-trivial:
    # per perf review, leave them to XLA rather than pallas_linear.
    ref_emb = ref_points @ params["emb_w"] + params["emb_b"]
    src_emb = src_points @ params["emb_w"] + params["emb_b"]
    ref = ref_feats @ params["in_w"] + params["in_b"]
    src = src_feats @ params["in_w"] + params["in_b"]

    for blk, lp in zip(params["blocks"], params["layers"]):
        if blk == "self":
            ref = _pallas_self_block(ref, lp, ref_emb, num_heads)
            src = _pallas_self_block(src, lp, src_emb, num_heads)
        else:  # cross, sequential update (parallel=False)
            ref = _pallas_cross_block(ref, src, lp, num_heads)
            src = _pallas_cross_block(src, ref, lp, num_heads)

    ref = pallas_linear(ref, params["out_w"], params["out_b"])
    src = pallas_linear(src, params["out_w"], params["out_b"])
    if return_pos_emb:
        return ref, src, ref_emb, src_emb
    return ref, src


# --------------------------- pure-JAX reference path ---------------------------

def _ref_rope(xh, emb, num_heads, dh):
    B, _, N, _ = xh.shape
    theta = emb.reshape(B, N, num_heads, dh).transpose(0, 2, 1, 3)
    x1, x2 = xh[..., : dh // 2], xh[..., dh // 2:]
    x_rot = jnp.concatenate([-x2, x1], axis=-1)
    return xh * jnp.cos(theta) + x_rot * jnp.sin(theta)


def _ref_mha(q, k, v, num_heads, emb_q=None, emb_k=None):
    B, Nq, C = q.shape
    dh = C // num_heads

    def split_heads(t):
        return t.reshape(B, -1, num_heads, dh).transpose(0, 2, 1, 3)

    qh, kh, vh = split_heads(q), split_heads(k), split_heads(v)
    if emb_q is not None:
        qh = _ref_rope(qh, emb_q, num_heads, dh)
        kh = _ref_rope(kh, emb_k, num_heads, dh)
    s = jnp.einsum("bhnd,bhmd->bhnm", qh, kh) / math.sqrt(dh)
    p = jax.nn.softmax(s, axis=-1)
    o = jnp.einsum("bhnm,bhmd->bhnd", p, vh)
    return o.transpose(0, 2, 1, 3).reshape(B, Nq, C)


def _ref_ln(y, gamma, beta, eps=1e-5):
    mean = jnp.mean(y, axis=-1, keepdims=True)
    var = jnp.mean((y - mean) ** 2, axis=-1, keepdims=True)
    return (y - mean) / jnp.sqrt(var + eps) * gamma + beta


def _ref_self_block(x, p, emb, num_heads):
    qkv = x @ p["wqkv"] + p["bqkv"]
    q, k, v = jnp.split(qkv, 3, axis=-1)
    o = _ref_mha(q, k, v, num_heads, emb, emb)
    x = _ref_ln(o @ p["wo"] + p["bo"] + x, p["ln1_g"], p["ln1_b"])
    h = jnp.maximum(x @ p["we"] + p["be"], 0.0)
    x = _ref_ln(h @ p["ws"] + p["bs"] + x, p["ln2_g"], p["ln2_b"])
    return x


def _ref_cross_block(x, mem, p, num_heads):
    q = x @ p["wq"] + p["bq"]
    kv = mem @ p["wkv"] + p["bkv"]
    k, v = jnp.split(kv, 2, axis=-1)
    o = _ref_mha(q, k, v, num_heads)
    x = _ref_ln(o @ p["wo"] + p["bo"] + x, p["ln1_g"], p["ln1_b"])
    h = jnp.maximum(x @ p["we"] + p["be"], 0.0)
    x = _ref_ln(h @ p["ws"] + p["bs"] + x, p["ln2_g"], p["ln2_b"])
    return x


def thdroformer_reference(params, ref_points, src_points, ref_feats, src_feats,
                          ref_masks=None, src_masks=None, return_pos_emb=False):
    num_heads = params["num_heads"]
    ref_emb = ref_points @ params["emb_w"] + params["emb_b"]
    src_emb = src_points @ params["emb_w"] + params["emb_b"]
    ref = ref_feats @ params["in_w"] + params["in_b"]
    src = src_feats @ params["in_w"] + params["in_b"]
    for blk, lp in zip(params["blocks"], params["layers"]):
        if blk == "self":
            ref = _ref_self_block(ref, lp, ref_emb, num_heads)
            src = _ref_self_block(src, lp, src_emb, num_heads)
        else:
            ref = _ref_cross_block(ref, src, lp, num_heads)
            src = _ref_cross_block(src, ref, lp, num_heads)
    ref = ref @ params["out_w"] + params["out_b"]
    src = src @ params["out_w"] + params["out_b"]
    if return_pos_emb:
        return ref, src, ref_emb, src_emb
    return ref, src


# ------------------------------ parameter init ------------------------------

def _init_linear(key, fan_in, fan_out):
    kw_, kb_ = jax.random.split(key)
    bound = 1.0 / math.sqrt(fan_in)
    w = jax.random.uniform(kw_, (fan_in, fan_out), jnp.float32, -bound, bound)
    b = jax.random.uniform(kb_, (fan_out,), jnp.float32, -bound, bound)
    return w, b


def init_params(key, input_dim, output_dim, hidden_dim, num_heads, num_layers):
    blocks = ["self", "cross"] * num_layers
    keys = jax.random.split(key, 3 + len(blocks))
    emb_w, emb_b = _init_linear(keys[0], 3, hidden_dim)
    in_w, in_b = _init_linear(keys[1], input_dim, hidden_dim)
    out_w, out_b = _init_linear(keys[2], hidden_dim, output_dim)
    layers = []
    for i in range(len(blocks)):
        ks = jax.random.split(keys[3 + i], 6)
        wq, bq = _init_linear(ks[0], hidden_dim, hidden_dim)
        wk, bk = _init_linear(ks[1], hidden_dim, hidden_dim)
        wv, bv = _init_linear(ks[2], hidden_dim, hidden_dim)
        wo, bo = _init_linear(ks[3], hidden_dim, hidden_dim)
        we, be = _init_linear(ks[4], hidden_dim, hidden_dim * 2)
        ws, bs = _init_linear(ks[5], hidden_dim * 2, hidden_dim)
        layers.append(dict(
            # packed form (self-attention fused QKV+RoPE kernel)
            wqkv=jnp.concatenate([wq, wk, wv], axis=1),
            bqkv=jnp.concatenate([bq, bk, bv], axis=0),
            # split forms (cross-attention: q from x, packed kv from memory)
            wq=wq, bq=bq,
            wkv=jnp.concatenate([wk, wv], axis=1),
            bkv=jnp.concatenate([bk, bv], axis=0),
            wo=wo, bo=bo, we=we, be=be, ws=ws, bs=bs,
            ln1_g=jnp.ones((hidden_dim,), jnp.float32),
            ln1_b=jnp.zeros((hidden_dim,), jnp.float32),
            ln2_g=jnp.ones((hidden_dim,), jnp.float32),
            ln2_b=jnp.zeros((hidden_dim,), jnp.float32),
        ))
    return dict(blocks=blocks, num_heads=num_heads,
                emb_w=emb_w, emb_b=emb_b, in_w=in_w, in_b=in_b,
                out_w=out_w, out_b=out_b, layers=layers)


# ----------------------------------- main -----------------------------------

if __name__ == "__main__":
    key = jax.random.PRNGKey(0)
    k_par, k_rp, k_sp, k_rf, k_sf = jax.random.split(key, 5)

    # hidden_dim = 128 keeps the packed-QKV lane blocks 128-aligned (lane-dense path).
    input_dim, output_dim, hidden_dim = 16, 16, 128
    num_heads, num_layers = 4, 1
    B, N, M = 2, 8, 8

    params = init_params(k_par, input_dim, output_dim, hidden_dim,
                         num_heads, num_layers)

    ref_points = jax.random.normal(k_rp, (B, N, 3), jnp.float32)
    src_points = jax.random.normal(k_sp, (B, M, 3), jnp.float32)
    ref_feats = jax.random.normal(k_rf, (B, N, input_dim), jnp.float32)
    src_feats = jax.random.normal(k_sf, (B, M, input_dim), jnp.float32)

    # ---- f32 Pallas path vs pure-JAX reference ----
    ref_out, src_out = thdroformer_forward(params, ref_points, src_points,
                                           ref_feats, src_feats)
    jax.block_until_ready((ref_out, src_out))
    assert ref_out.shape == (B, N, output_dim)
    assert src_out.shape == (B, M, output_dim)

    ref_chk, src_chk = thdroformer_reference(params, ref_points, src_points,
                                             ref_feats, src_feats)
    # tolerance allows the EUP approx-reciprocal softmax denominator
    np.testing.assert_allclose(np.asarray(ref_out), np.asarray(ref_chk),
                               atol=5e-3, rtol=5e-3)
    np.testing.assert_allclose(np.asarray(src_out), np.asarray(src_chk),
                               atol=5e-3, rtol=5e-3)

    # ---- bf16 MXU path: loose smoke check vs f32 reference ----
    ref_bf, src_bf = thdroformer_forward(params, ref_points, src_points,
                                         ref_feats, src_feats,
                                         compute_dtype=jnp.bfloat16)
    jax.block_until_ready((ref_bf, src_bf))
    assert bool(jnp.all(jnp.isfinite(ref_bf.astype(jnp.float32))))
    assert bool(jnp.all(jnp.isfinite(src_bf.astype(jnp.float32))))
    np.testing.assert_allclose(np.asarray(ref_bf, dtype=np.float32),
                               np.asarray(ref_chk), atol=0.25, rtol=0.25)
    np.testing.assert_allclose(np.asarray(src_bf, dtype=np.float32),
                               np.asarray(src_chk), atol=0.25, rtol=0.25)

    print("KERNEL_OK")
</pallas_src>

<mosaic_0001>
module attributes {stable_mosaic.version = 11 : i64} {
  func.func @_qkv_rope_kernel(%arg0: i32, %arg1: i32, %arg2: memref<16x128xf32, #tpu.memory_space<vmem>>, %arg3: memref<128x384xf32, #tpu.memory_space<vmem>>, %arg4: memref<1x384xf32, #tpu.memory_space<vmem>>, %arg5: memref<16x128xf32, #tpu.memory_space<vmem>>, %arg6: memref<16x384xf32, #tpu.memory_space<vmem>>, %arg7: memref<16x384xf32, #tpu.memory_space<vmem>>) attributes {dimension_semantics = [#tpu.dimension_semantics<parallel>, #tpu.dimension_semantics<arbitrary>], iteration_bounds = array<i64: 1, 1>, scalar_prefetch = 0 : i64, scratch_operands = 1 : i64, tpu.core_type = #tpu.core_type<tc>, window_params = [{transform_indices = @transform_0, window_bounds = array<i64: 16, 128>}, {transform_indices = @transform_1, window_bounds = array<i64: 128, 384>}, {pipeline_mode = #tpu.pipeline_mode<synchronous>, transform_indices = @transform_2, window_bounds = array<i64: 1, 384>}, {transform_indices = @transform_3, window_bounds = array<i64: 16, 128>}, {transform_indices = @transform_4, window_bounds = array<i64: 16, 384>}]} {
    %c0_i32 = arith.constant 0 : i32
    %0 = arith.cmpi eq, %arg1, %c0_i32 : i32
    %1 = arith.extui %0 : i1 to i32
    %c0_i32_0 = arith.constant 0 : i32
    %2 = arith.cmpi ne, %1, %c0_i32_0 : i32
    scf.if %2 {
      %cst_10 = arith.constant 0.000000e+00 : f32
      %12 = vector.broadcast %cst_10 : f32 to vector<16x384xf32>
      %c0_11 = arith.constant 0 : index
      %c0_12 = arith.constant 0 : index
      %13 = vector.load %arg7[%c0_11, %c0_12] : memref<16x384xf32, #tpu.memory_space<vmem>>, vector<16x384xf32>
      tpu.vector_store %arg7[%c0_11, %c0_12], %12 {strides = array<i32>} : memref<16x384xf32, #tpu.memory_space<vmem>>, vector<16x384xf32>,
    } else {
    }
    %c0 = arith.constant 0 : index
    %c0_1 = arith.constant 0 : index
    %3 = vector.load %arg7[%c0, %c0_1] : memref<16x384xf32, #tpu.memory_space<vmem>>, vector<16x384xf32>
    %c0_2 = arith.constant 0 : index
    %c0_3 = arith.constant 0 : index
    %4 = vector.load %arg2[%c0_2, %c0_3] : memref<16x128xf32, #tpu.memory_space<vmem>>, vector<16x128xf32>
    %c0_4 = arith.constant 0 : index
    %c0_5 = arith.constant 0 : index
    %5 = vector.load %arg3[%c0_4, %c0_5] : memref<128x384xf32, #tpu.memory_space<vmem>>, vector<128x384xf32>
    %cst = arith.constant dense<0.000000e+00> : vector<16x384xf32>
    %6 = tpu.matmul %4, %5, %cst {dimension_numbers = #tpu.dot_dimension_numbers<[1], [0], [0], [1], [0, 0, 1, 1], [], []>} : vector<16x128xf32>, vector<128x384xf32>, vector<16x384xf32> -> vector<16x384xf32>
    %7 = arith.addf %3, %6 : vector<16x384xf32>
    %c0_6 = arith.constant 0 : index
    %c0_7 = arith.constant 0 : index
    %8 = vector.load %arg7[%c0_6, %c0_7] : memref<16x384xf32, #tpu.memory_space<vmem>>, vector<16x384xf32>
    tpu.vector_store %arg7[%c0_6, %c0_7], %7 {strides = array<i32>} : memref<16x384xf32, #tpu.memory_space<vmem>>, vector<16x384xf32>,
    %c0_i32_8 = arith.constant 0 : i32
    %9 = arith.cmpi eq, %arg1, %c0_i32_8 : i32
    %10 = arith.extui %9 : i1 to i32
    %c0_i32_9 = arith.constant 0 : i32
    %11 = arith.cmpi ne, %10, %c0_i32_9 : i32
    scf.if %11 {
      %c0_10 = arith.constant 0 : index
      %c0_11 = arith.constant 0 : index
      %12 = vector.load %arg7[%c0_10, %c0_11] : memref<16x384xf32, #tpu.memory_space<vmem>>, vector<16x384xf32>
      %c0_12 = arith.constant 0 : index
      %c0_13 = arith.constant 0 : index
      %13 = vector.load %arg4[%c0_12, %c0_13] : memref<1x384xf32, #tpu.memory_space<vmem>>, vector<1x384xf32>
      %14 = vector.broadcast %13 : vector<1x384xf32> to vector<16x384xf32>
      %15 = arith.addf %12, %14 : vector<16x384xf32>
      %c0_14 = arith.constant 0 : index
      %c0_15 = arith.constant 0 : index
      %16 = vector.load %arg5[%c0_14, %c0_15] : memref<16x128xf32, #tpu.memory_space<vmem>>, vector<16x128xf32>
      %17 = math.cos %16 : vector<16x128xf32>
      %18 = math.sin %16 : vector<16x128xf32>
      %19 = vector.extract_strided_slice %15 {offsets = [0, 0], sizes = [16, 128], strides = [1, 1]} : vector<16x384xf32> to vector<16x128xf32>
      %20 = vector.extract_strided_slice %15 {offsets = [0, 128], sizes = [16, 128], strides = [1, 1]} : vector<16x384xf32> to vector<16x128xf32>
      %21 = vector.extract_strided_slice %15 {offsets = [0, 256], sizes = [16, 128], strides = [1, 1]} : vector<16x384xf32> to vector<16x128xf32>
      %22 = arith.mulf %19, %17 : vector<16x128xf32>
      %23 = vector.extract_strided_slice %19 {offsets = [0, 0], sizes = [16, 32], strides = [1, 1]} : vector<16x128xf32> to vector<16x32xf32>
      %24 = vector.extract_strided_slice %23 {offsets = [0, 16], sizes = [16, 16], strides = [1, 1]} : vector<16x32xf32> to vector<16x16xf32>
      %cst_16 = arith.constant 0.000000e+00 : f32
      %25 = vector.broadcast %cst_16 : f32 to vector<16x16xf32>
      %26 = arith.subf %25, %24 : vector<16x16xf32>
      %27 = vector.extract_strided_slice %23 {offsets = [0, 0], sizes = [16, 16], strides = [1, 1]} : vector<16x32xf32> to vector<16x16xf32>
      %28 = tpu.concatenate %26, %27 in 1 : vector<16x16xf32>, vector<16x16xf32> -> vector<16x32xf32>
      %29 = vector.extract_strided_slice %19 {offsets = [0, 32], sizes = [16, 32], strides = [1, 1]} : vector<16x128xf32> to vector<16x32xf32>
      %30 = vector.extract_strided_slice %29 {offsets = [0, 16], sizes = [16, 16], strides = [1, 1]} : vector<16x32xf32> to vector<16x16xf32>
      %cst_17 = arith.constant 0.000000e+00 : f32
      %31 = vector.broadcast %cst_17 : f32 to vector<16x16xf32>
      %32 = arith.subf %31, %30 : vector<16x16xf32>
      %33 = vector.extract_strided_slice %29 {offsets = [0, 0], sizes = [16, 16], strides = [1, 1]} : vector<16x32xf32> to vector<16x16xf32>
      %34 = tpu.concatenate %32, %33 in 1 : vector<16x16xf32>, vector<16x16xf32> -> vector<16x32xf32>
      %35 = vector.extract_strided_slice %19 {offsets = [0, 64], sizes = [16, 32], strides = [1, 1]} : vector<16x128xf32> to vector<16x32xf32>
      %36 = vector.extract_strided_slice %35 {offsets = [0, 16], sizes = [16, 16], strides = [1, 1]} : vector<16x32xf32> to vector<16x16xf32>
      %cst_18 = arith.constant 0.000000e+00 : f32
      %37 = vector.broadcast %cst_18 : f32 to vector<16x16xf32>
      %38 = arith.subf %37, %36 : vector<16x16xf32>
      %39 = vector.extract_strided_slice %35 {offsets = [0, 0], sizes = [16, 16], strides = [1, 1]} : vector<16x32xf32> to vector<16x16xf32>
      %40 = tpu.concatenate %38, %39 in 1 : vector<16x16xf32>, vector<16x16xf32> -> vector<16x32xf32>
      %41 = vector.extract_strided_slice %19 {offsets = [0, 96], sizes = [16, 32], strides = [1, 1]} : vector<16x128xf32> to vector<16x32xf32>
      %42 = vector.extract_strided_slice %41 {offsets = [0, 16], sizes = [16, 16], strides = [1, 1]} : vector<16x32xf32> to vector<16x16xf32>
      %cst_19 = arith.constant 0.000000e+00 : f32
      %43 = vector.broadcast %cst_19 : f32 to vector<16x16xf32>
      %44 = arith.subf %43, %42 : vector<16x16xf32>
      %45 = vector.extract_strided_slice %41 {offsets = [0, 0], sizes = [16, 16], strides = [1, 1]} : vector<16x32xf32> to vector<16x16xf32>
      %46 = tpu.concatenate %44, %45 in 1 : vector<16x16xf32>, vector<16x16xf32> -> vector<16x32xf32>
      %47 = tpu.concatenate %28, %34, %40, %46 in 1 : vector<16x32xf32>, vector<16x32xf32>, vector<16x32xf32>, vector<16x32xf32> -> vector<16x128xf32>
      %48 = arith.mulf %47, %18 : vector<16x128xf32>
      %49 = arith.addf %22, %48 : vector<16x128xf32>
      %cst_20 = arith.constant 0.176776692 : f32
      %50 = vector.broadcast %cst_20 : f32 to vector<16x128xf32>
      %51 = arith.mulf %49, %50 : vector<16x128xf32>
      %52 = arith.mulf %20, %17 : vector<16x128xf32>
      %53 = vector.extract_strided_slice %20 {offsets = [0, 0], sizes = [16, 32], strides = [1, 1]} : vector<16x128xf32> to vector<16x32xf32>
      %54 = vector.extract_strided_slice %53 {offsets = [0, 16], sizes = [16, 16], strides = [1, 1]} : vector<16x32xf32> to vector<16x16xf32>
      %cst_21 = arith.constant 0.000000e+00 : f32
      %55 = vector.broadcast %cst_21 : f32 to vector<16x16xf32>
      %56 = arith.subf %55, %54 : vector<16x16xf32>
      %57 = vector.extract_strided_slice %53 {offsets = [0, 0], sizes = [16, 16], strides = [1, 1]} : vector<16x32xf32> to vector<16x16xf32>
      %58 = tpu.concatenate %56, %57 in 1 : vector<16x16xf32>, vector<16x16xf32> -> vector<16x32xf32>
      %59 = vector.extract_strided_slice %20 {offsets = [0, 32], sizes = [16, 32], strides = [1, 1]} : vector<16x128xf32> to vector<16x32xf32>
      %60 = vector.extract_strided_slice %59 {offsets = [0, 16], sizes = [16, 16], strides = [1, 1]} : vector<16x32xf32> to vector<16x16xf32>
      %cst_22 = arith.constant 0.000000e+00 : f32
      %61 = vector.broadcast %cst_22 : f32 to vector<16x16xf32>
      %62 = arith.subf %61, %60 : vector<16x16xf32>
      %63 = vector.extract_strided_slice %59 {offsets = [0, 0], sizes = [16, 16], strides = [1, 1]} : vector<16x32xf32> to vector<16x16xf32>
      %64 = tpu.concatenate %62, %63 in 1 : vector<16x16xf32>, vector<16x16xf32> -> vector<16x32xf32>
      %65 = vector.extract_strided_slice %20 {offsets = [0, 64], sizes = [16, 32], strides = [1, 1]} : vector<16x128xf32> to vector<16x32xf32>
      %66 = vector.extract_strided_slice %65 {offsets = [0, 16], sizes = [16, 16], strides = [1, 1]} : vector<16x32xf32> to vector<16x16xf32>
      %cst_23 = arith.constant 0.000000e+00 : f32
      %67 = vector.broadcast %cst_23 : f32 to vector<16x16xf32>
      %68 = arith.subf %67, %66 : vector<16x16xf32>
      %69 = vector.extract_strided_slice %65 {offsets = [0, 0], sizes = [16, 16], strides = [1, 1]} : vector<16x32xf32> to vector<16x16xf32>
      %70 = tpu.concatenate %68, %69 in 1 : vector<16x16xf32>, vector<16x16xf32> -> vector<16x32xf32>
      %71 = vector.extract_strided_slice %20 {offsets = [0, 96], sizes = [16, 32], strides = [1, 1]} : vector<16x128xf32> to vector<16x32xf32>
      %72 = vector.extract_strided_slice %71 {offsets = [0, 16], sizes = [16, 16], strides = [1, 1]} : vector<16x32xf32> to vector<16x16xf32>
      %cst_24 = arith.constant 0.000000e+00 : f32
      %73 = vector.broadcast %cst_24 : f32 to vector<16x16xf32>
      %74 = arith.subf %73, %72 : vector<16x16xf32>
      %75 = vector.extract_strided_slice %71 {offsets = [0, 0], sizes = [16, 16], strides = [1, 1]} : vector<16x32xf32> to vector<16x16xf32>
      %76 = tpu.concatenate %74, %75 in 1 : vector<16x16xf32>, vector<16x16xf32> -> vector<16x32xf32>
      %77 = tpu.concatenate %58, %64, %70, %76 in 1 : vector<16x32xf32>, vector<16x32xf32>, vector<16x32xf32>, vector<16x32xf32> -> vector<16x128xf32>
      %78 = arith.mulf %77, %18 : vector<16x128xf32>
      %79 = arith.addf %52, %78 : vector<16x128xf32>
      %80 = tpu.concatenate %51, %79, %21 in 1 : vector<16x128xf32>, vector<16x128xf32>, vector<16x128xf32> -> vector<16x384xf32>
      %c0_25 = arith.constant 0 : index
      %c0_26 = arith.constant 0 : index
      %81 = vector.load %arg6[%c0_25, %c0_26] : memref<16x384xf32, #tpu.memory_space<vmem>>, vector<16x384xf32>
      tpu.vector_store %arg6[%c0_25, %c0_26], %80 {strides = array<i32>} : memref<16x384xf32, #tpu.memory_space<vmem>>, vector<16x384xf32>,
    } else {
    }
    return
  }
  func.func @transform_0(%arg0: i32, %arg1: i32) -> (i32, i32) {
    %c0_i32 = arith.constant 0 : i32
    return %arg0, %arg1 : i32, i32
  }
  func.func @transform_1(%arg0: i32, %arg1: i32) -> (i32, i32) {
    %c0_i32 = arith.constant 0 : i32
    %c0_i32_0 = arith.constant 0 : i32
    return %arg1, %c0_i32 : i32, i32
  }
  func.func @transform_2(%arg0: i32, %arg1: i32) -> (i32, i32) {
    %c0_i32 = arith.constant 0 : i32
    %c0_i32_0 = arith.constant 0 : i32
    %c0_i32_1 = arith.constant 0 : i32
    return %c0_i32, %c0_i32_0 : i32, i32
  }
  func.func @transform_3(%arg0: i32, %arg1: i32) -> (i32, i32) {
    %c0_i32 = arith.constant 0 : i32
    %c0_i32_0 = arith.constant 0 : i32
    return %arg0, %c0_i32 : i32, i32
  }
  func.func @transform_4(%arg0: i32, %arg1: i32) -> (i32, i32) {
    %c0_i32 = arith.constant 0 : i32
    %c0_i32_0 = arith.constant 0 : i32
    return %arg0, %c0_i32 : i32, i32
  }
}

</mosaic_0001>

<llo_original>
// kernel: tpu_custom_call.1
$region0: #{tpu_custom_call.1}
  #allocation0 [shape = 'u32[]', space=smem, size = 0x4, offset = 0x4, fixed_abs, tag = 'smem constant byte address 0x4 - core index']
  #allocation1 [shape = 'u32[144,128]{1,0:T(1,128)}', space=vmem, size = 0x12000, scoped, tag = 'internal scratch']
  #allocation2 [shape = 'f32[16,384]{1,0:T(8,128)}', space=vmem, size = 0x6000, scoped, tag = 'scratch operand']
  %s0 = inlined_call_operand.hbm [shape: f32[16,128], index: 0, kind: input, shape index: {}]
  %s1 = inlined_call_operand.hbm [shape: f32[128,384], index: 1, kind: input, shape index: {}]
  %s2 = inlined_call_operand.vmem [shape: f32[1,384], index: 2, kind: input, shape index: {}]
  %s3 = inlined_call_operand.hbm [shape: f32[16,128], index: 3, kind: input, shape index: {}]
  %s4 = inlined_call_operand.hbm [shape: f32[16,384], index: 4, kind: output, shape index: {}]
  %s5 = sld [smem:[#allocation0]]
  $region46: #{tpu_custom_call.1} parent=0
    _
  %s7 = ssub.s32 1, %s5
  %s8 = scalar_select 0, %s7, %s5
  $region1: #{tpu_custom_call.1} parent=0
    #allocation3 [shape = 'u8[8192]{0}', space=vmem, size = 0x2000, scoped, tag = 'input window, operand 0, single buffered']
    #allocation4 [shape = 's32[1]{0}', space=sflag, size = 0x4, scoped, tag = 'scoped memory for tpu_custom_call.1']
    #allocation5 [shape = 's32[1]{0}', space=sflag, size = 0x4, scoped, tag = 'scoped memory for tpu_custom_call.1']
    #allocation6 [shape = 'u8[196608]{0}', space=vmem, size = 0x30000, scoped, tag = 'input window, operand 1, single buffered']
    #allocation7 [shape = 's32[1]{0}', space=sflag, size = 0x4, scoped, tag = 'scoped memory for tpu_custom_call.1']
    #allocation8 [shape = 'u8[8192]{0}', space=vmem, size = 0x2000, scoped, tag = 'input window, operand 3, single buffered']
    #allocation9 [shape = 'u8[24576]{0}', space=vmem, size = 0x6000, scoped, tag = 'output window, operand 0, single buffered']
    %9 = vsyncpa [#allocation4], 0
    %10 = vsyncpa [#allocation7], 0
    %11 = vsyncpa [#allocation5], 0
    // Predicated region
    $region2: #{tpu_custom_call.1} parent=1 // pred_check
      _
    $region3: #{tpu_custom_call.1} parent=1 // pred_check_branch
      %13 = sbr.rel (0) target = $region5
    $region4: #{tpu_custom_call.1} parent=1 // pred_region
      %s15 = ssub.s32 256, 256
      %16 = vsyncadd [#allocation4], %s15
      %s17 = sshll.u32 [#allocation3], 4
      %s18 = int_to_ptr.vmem [resolvable:$true] %s17
      %23 = dma.hbm_to_vmem [thread:$0]  %s0, 256, %s18, [#allocation4], 128, 128, 8
    $region5: #{tpu_custom_call.1} parent=1 // pred_fallthru
      _
    // Predicated region
    $region6: #{tpu_custom_call.1} parent=1 // pred_check
      _
    $region7: #{tpu_custom_call.1} parent=1 // pred_check_branch
      %25 = sbr.rel (0) target = $region9
    $region8: #{tpu_custom_call.1} parent=1 // pred_region
      %s27 = ssub.s32 6144, 6144
      %28 = vsyncadd [#allocation7], %s27
      %s29 = sshll.u32 [#allocation6], 4
      %s30 = int_to_ptr.vmem [resolvable:$true] %s29
      %35 = dma.hbm_to_vmem [thread:$0]  %s1, 6144, %s30, [#allocation7], 384, 384, 24
    $region9: #{tpu_custom_call.1} parent=1 // pred_fallthru
      _
    // Predicated region
    $region10: #{tpu_custom_call.1} parent=1 // pred_check
      _
    $region11: #{tpu_custom_call.1} parent=1 // pred_check_branch
      %37 = sbr.rel (0) target = $region13
    $region12: #{tpu_custom_call.1} parent=1 // pred_region
      _
    $region13: #{tpu_custom_call.1} parent=1 // pred_fallthru
      _
    // Predicated region
    $region14: #{tpu_custom_call.1} parent=1 // pred_check
      _
    $region15: #{tpu_custom_call.1} parent=1 // pred_check_branch
      %39 = sbr.rel (0) target = $region17
    $region16: #{tpu_custom_call.1} parent=1 // pred_region
      %s41 = ssub.s32 256, 256
      %42 = vsyncadd [#allocation7], %s41
      %s43 = sshll.u32 [#allocation8], 4
      %s44 = int_to_ptr.vmem [resolvable:$true] %s43
      %49 = dma.hbm_to_vmem [thread:$0]  %s3, 256, %s44, [#allocation7], 128, 128, 8
    $region17: #{tpu_custom_call.1} parent=1 // pred_fallthru
      _
    // Predicated region
    $region18: #{tpu_custom_call.1} parent=1 // pred_check
      _
    $region19: #{tpu_custom_call.1} parent=1 // pred_check_branch
      %51 = sbr.rel (0) target = $region21
    $region20: #{tpu_custom_call.1} parent=1 // pred_region
      %52 = dma.done [#allocation4], 256
    $region21: #{tpu_custom_call.1} parent=1 // pred_fallthru
      _
    // Predicated region
    $region22: #{tpu_custom_call.1} parent=1 // pred_check
      _
    $region23: #{tpu_custom_call.1} parent=1 // pred_check_branch
      %54 = sbr.rel (0) target = $region25
    $region24: #{tpu_custom_call.1} parent=1 // pred_region
      %55 = dma.done [#allocation7], 6144
    $region25: #{tpu_custom_call.1} parent=1 // pred_fallthru
      _
    // Predicated region
    $region26: #{tpu_custom_call.1} parent=1 // pred_check
      _
    $region27: #{tpu_custom_call.1} parent=1 // pred_check_branch
      %57 = sbr.rel (0) target = $region29
    $region28: #{tpu_custom_call.1} parent=1 // pred_region
      %58 = dma.done [#allocation7], 256
    $region29: #{tpu_custom_call.1} parent=1 // pred_fallthru
      _
    %p59 = scmp.eq.s32.totalorder 0, 0
    // Predicated region
    $region30: #{tpu_custom_call.1} parent=1 // pred_check
      %p60 = pneg %p59
    $region31: #{tpu_custom_call.1} parent=1 // pred_check_branch
      %62 = sbr.rel (%p60) target = $region33
    $region32: #{tpu_custom_call.1} parent=1 // pred_region
      %63 = vst [vmem:[#allocation2] sm:$0xff] 0.0
      %64 = vst [vmem:[#allocation2 + $0x8] sm:$0xff] 0.0
      %65 = vst [vmem:[#allocation2 + $0x10] sm:$0xff] 0.0
      %66 = vst [vmem:[#allocation2 + $0x18] sm:$0xff] 0.0
      %67 = vst [vmem:[#allocation2 + $0x20] sm:$0xff] 0.0
      %68 = vst [vmem:[#allocation2 + $0x28] sm:$0xff] 0.0
    $region33: #{tpu_custom_call.1} parent=1 // pred_fallthru
      _
    %v69 = vld [vmem:[#allocation2] sm:$0xff]
    %v70 = vld [vmem:[#allocation2 + $0x8] sm:$0xff]
    %v71 = vld [vmem:[#allocation2 + $0x10] sm:$0xff]
    %v72 = vld [vmem:[#allocation2 + $0x18] sm:$0xff]
    %v73 = vld [vmem:[#allocation2 + $0x20] sm:$0xff]
    %v74 = vld [vmem:[#allocation2 + $0x28] sm:$0xff]
    %v75 = vld [vmem:[#allocation3] sm:$0xff]
    %v76 = vld [vmem:[#allocation3 + $0x8] sm:$0xff]
    %v77 = vld [vmem:[#allocation6] sm:$0xff]
    %v78 = vld [vmem:[#allocation6 + $0x8] sm:$0xff]
    %v79 = vld [vmem:[#allocation6 + $0x10] sm:$0xff]
    %v80 = vld [vmem:[#allocation6 + $0x18] sm:$0xff]
    %v81 = vld [vmem:[#allocation6 + $0x20] sm:$0xff]
    %v82 = vld [vmem:[#allocation6 + $0x28] sm:$0xff]
    %v83 = vld [vmem:[#allocation6 + $0x30] sm:$0xff]
    %v84 = vld [vmem:[#allocation6 + $0x38] sm:$0xff]
    %v85 = vld [vmem:[#allocation6 + $0x40] sm:$0xff]
    %v86 = vld [vmem:[#allocation6 + $0x48] sm:$0xff]
    %v87 = vld [vmem:[#allocation6 + $0x50] sm:$0xff]
    %v88 = vld [vmem:[#allocation6 + $0x58] sm:$0xff]
    %v89 = vld [vmem:[#allocation6 + $0x60] sm:$0xff]
    %v90 = vld [vmem:[#allocation6 + $0x68] sm:$0xff]
    %v91 = vld [vmem:[#allocation6 + $0x70] sm:$0xff]
    %v92 = vld [vmem:[#allocation6 + $0x78] sm:$0xff]
    %v93 = vld [vmem:[#allocation6 + $0x80] sm:$0xff]
    %v94 = vld [vmem:[#allocation6 + $0x88] sm:$0xff]
    %v95 = vld [vmem:[#allocation6 + $0x90] sm:$0xff]
    %v96 = vld [vmem:[#allocation6 + $0x98] sm:$0xff]
    %v97 = vld [vmem:[#allocation6 + $0xa0] sm:$0xff]
    %v98 = vld [vmem:[#allocation6 + $0xa8] sm:$0xff]
    %v99 = vld [vmem:[#allocation6 + $0xb0] sm:$0xff]
    %v100 = vld [vmem:[#allocation6 + $0xb8] sm:$0xff]
    %v101 = vld [vmem:[#allocation6 + $0xc0] sm:$0xff]
    %v102 = vld [vmem:[#allocation6 + $0xc8] sm:$0xff]
    %v103 = vld [vmem:[#allocation6 + $0xd0] sm:$0xff]
    %v104 = vld [vmem:[#allocation6 + $0xd8] sm:$0xff]
    %v105 = vld [vmem:[#allocation6 + $0xe0] sm:$0xff]
    %v106 = vld [vmem:[#allocation6 + $0xe8] sm:$0xff]
    %v107 = vld [vmem:[#allocation6 + $0xf0] sm:$0xff]
    %v108 = vld [vmem:[#allocation6 + $0xf8] sm:$0xff]
    %v109 = vld [vmem:[#allocation6 + $0x100] sm:$0xff]
    %v110 = vld [vmem:[#allocation6 + $0x108] sm:$0xff]
    %v111 = vld [vmem:[#allocation6 + $0x110] sm:$0xff]
    %v112 = vld [vmem:[#allocation6 + $0x118] sm:$0xff]
    %v113 = vld [vmem:[#allocation6 + $0x120] sm:$0xff]
    %v114 = vld [vmem:[#allocation6 + $0x128] sm:$0xff]
    %v115 = vld [vmem:[#allocation6 + $0x130] sm:$0xff]
    %v116 = vld [vmem:[#allocation6 + $0x138] sm:$0xff]
    %v117 = vld [vmem:[#allocation6 + $0x140] sm:$0xff]
    %v118 = vld [vmem:[#allocation6 + $0x148] sm:$0xff]
    %v119 = vld [vmem:[#allocation6 + $0x150] sm:$0xff]
    %v120 = vld [vmem:[#allocation6 + $0x158] sm:$0xff]
    %v121 = vld [vmem:[#allocation6 + $0x160] sm:$0xff]
    %v122 = vld [vmem:[#allocation6 + $0x168] sm:$0xff]
    %v123 = vld [vmem:[#allocation6 + $0x170] sm:$0xff]
    %v124 = vld [vmem:[#allocation6 + $0x178] sm:$0xff]
    %125 = vmatprep.subr.mxu0 %v78
    %126 = vmatpush1.msra.mxu0 %v77
    %127 = vmatprep.subr.mxu0 %v81
    %128 = vmatpush1.msra.mxu0 %v80
    %129 = vmatprep.subr.mxu0 %v84
    %130 = vmatpush1.msra.mxu0 %v83
    %131 = vmatprep.subr.mxu0 %v87
    %132 = vmatpush1.msra.mxu0 %v86
    %133 = vmatprep.subr.mxu0 %v90
    %134 = vmatpush1.msra.mxu0 %v89
    %135 = vmatprep.subr.mxu0 %v93
    %136 = vmatpush1.msra.mxu0 %v92
    %137 = vmatprep.subr.mxu0 %v96
    %138 = vmatpush1.msra.mxu0 %v95
    %139 = vmatprep.subr.mxu0 %v99
    %140 = vmatpush1.msra.mxu0 %v98
    %141 = vmatprep.subr.mxu0 %v102
    %142 = vmatpush1.msra.mxu0 %v101
    %143 = vmatprep.subr.mxu0 %v105
    %144 = vmatpush1.msra.mxu0 %v104
    %145 = vmatprep.subr.mxu0 %v108
    %146 = vmatpush1.msra.mxu0 %v107
    %147 = vmatprep.subr.mxu0 %v111
    %148 = vmatpush1.msra.mxu0 %v110
    %149 = vmatprep.subr.mxu0 %v114
    %150 = vmatpush1.msra.mxu0 %v113
    %151 = vmatprep.subr.mxu0 %v117
    %152 = vmatpush1.msra.mxu0 %v116
    %153 = vmatprep.subr.mxu0 %v120
    %154 = vmatpush1.msra.mxu0 %v119
    %155 = vmatprep.subr.mxu0 %v123
    %156 = vmatpush1.msra.mxu0 %v122
    %157 = vmatprep.subr.mxu0 0.0
    %158 = vmatpush1.msra.mxu0 0.0
    %159 = vmatprep.subr.mxu0 0.0
    %160 = vmatpush1.msra.mxu0 0.0
    %161 = vmatprep.subr.mxu0 0.0
    %162 = vmatpush1.msra.mxu0 0.0
    %163 = vmatprep.subr.mxu0 0.0
    %164 = vmatpush1.msra.mxu0 0.0
    %165 = vmatprep.subr.mxu0 0.0
    %166 = vmatpush1.msra.mxu0 0.0
    %167 = vmatprep.subr.mxu0 0.0
    %168 = vmatpush1.msra.mxu0 0.0
    %169 = vmatprep.subr.mxu0 0.0
    %170 = vmatpush1.msra.mxu0 0.0
    %171 = vmatprep.subr.mxu0 0.0
    %172 = vmatpush1.msra.mxu0 0.0
    %173 = vmatprep.subr.mxu0 0.0
    %174 = vmatpush1.msra.mxu0 0.0
    %175 = vmatprep.subr.mxu0 0.0
    %176 = vmatpush1.msra.mxu0 0.0
    %177 = vmatprep.subr.mxu0 0.0
    %178 = vmatpush1.msra.mxu0 0.0
    %179 = vmatprep.subr.mxu0 0.0
    %180 = vmatpush1.msra.mxu0 0.0
    %181 = vmatprep.subr.mxu0 0.0
    %182 = vmatpush1.msra.mxu0 0.0
    %183 = vmatprep.subr.mxu0 0.0
    %184 = vmatpush1.msra.mxu0 0.0
    %185 = vmatprep.subr.mxu0 0.0
    %186 = vmatpush1.msra.mxu0 0.0
    %187 = vmatprep.subr.mxu0 0.0
    %188 = vmatpush1.msra.mxu0 0.0
    %189 = vmatprep.mubr.f32.mxu0 0.0
    %190 = vmatmul.mubr.f32.gmra.mrb[0].mxu0 %v75
    %v191 = vpop.f32.mrb[0].mxu0
    %v192 = vadd.f32 0.0, %v191
    %v193 = vpop.f32.mrb[0].mxu0
    %v194 = vadd.f32 0.0, %v193
    %195 = vmatprep.mubr.f32.mxu0 0.0
    %196 = vmatmul.mubr.f32.gmra.mrb[0].mxu0 %v76
    %v197 = vpop.f32.mrb[0].mxu0
    %v198 = vadd.f32 0.0, %v197
    %v199 = vpop.f32.mrb[0].mxu0
    %v200 = vadd.f32 0.0, %v199
    %201 = vdwg.mxu0
    %202 = vmatprep.subr.mxu0 0.0
    %203 = vmatpush1.msra.mxu0 %v79
    %204 = vmatprep.subr.mxu0 0.0
    %205 = vmatpush1.msra.mxu0 %v82
    %206 = vmatprep.subr.mxu0 0.0
    %207 = vmatpush1.msra.mxu0 %v85
    %208 = vmatprep.subr.mxu0 0.0
    %209 = vmatpush1.msra.mxu0 %v88
    %210 = vmatprep.subr.mxu0 0.0
    %211 = vmatpush1.msra.mxu0 %v91
    %212 = vmatprep.subr.mxu0 0.0
    %213 = vmatpush1.msra.mxu0 %v94
    %214 = vmatprep.subr.mxu0 0.0
    %215 = vmatpush1.msra.mxu0 %v97
    %216 = vmatprep.subr.mxu0 0.0
    %217 = vmatpush1.msra.mxu0 %v100
    %218 = vmatprep.subr.mxu0 0.0
    %219 = vmatpush1.msra.mxu0 %v103
    %220 = vmatprep.subr.mxu0 0.0
    %221 = vmatpush1.msra.mxu0 %v106
    %222 = vmatprep.subr.mxu0 0.0
    %223 = vmatpush1.msra.mxu0 %v109
    %224 = vmatprep.subr.mxu0 0.0
    %225 = vmatpush1.msra.mxu0 %v112
    %226 = vmatprep.subr.mxu0 0.0
    %227 = vmatpush1.msra.mxu0 %v115
    %228 = vmatprep.subr.mxu0 0.0
    %229 = vmatpush1.msra.mxu0 %v118
    %230 = vmatprep.subr.mxu0 0.0
    %231 = vmatpush1.msra.mxu0 %v121
    %232 = vmatprep.subr.mxu0 0.0
    %233 = vmatpush1.msra.mxu0 %v124
    %234 = vmatprep.subr.mxu0 0.0
    %235 = vmatpush1.msra.mxu0 0.0
    %236 = vmatprep.subr.mxu0 0.0
    %237 = vmatpush1.msra.mxu0 0.0
    %238 = vmatprep.subr.mxu0 0.0
    %239 = vmatpush1.msra.mxu0 0.0
    %240 = vmatprep.subr.mxu0 0.0
    %241 = vmatpush1.msra.mxu0 0.0
    %242 = vmatprep.subr.mxu0 0.0
    %243 = vmatpush1.msra.mxu0 0.0
    %244 = vmatprep.subr.mxu0 0.0
    %245 = vmatpush1.msra.mxu0 0.0
    %246 = vmatprep.subr.mxu0 0.0
    %247 = vmatpush1.msra.mxu0 0.0
    %248 = vmatprep.subr.mxu0 0.0
    %249 = vmatpush1.msra.mxu0 0.0
    %250 = vmatprep.subr.mxu0 0.0
    %251 = vmatpush1.msra.mxu0 0.0
    %252 = vmatprep.subr.mxu0 0.0
    %253 = vmatpush1.msra.mxu0 0.0
    %254 = vmatprep.subr.mxu0 0.0
    %255 = vmatpush1.msra.mxu0 0.0
    %256 = vmatprep.subr.mxu0 0.0
    %257 = vmatpush1.msra.mxu0 0.0
    %258 = vmatprep.subr.mxu0 0.0
    %259 = vmatpush1.msra.mxu0 0.0
    %260 = vmatprep.subr.mxu0 0.0
    %261 = vmatpush1.msra.mxu0 0.0
    %262 = vmatprep.subr.mxu0 0.0
    %263 = vmatpush1.msra.mxu0 0.0
    %264 = vmatprep.subr.mxu0 0.0
    %265 = vmatpush1.msra.mxu0 0.0
    %266 = vmatprep.mubr.f32.mxu0 0.0
    %267 = vmatmul.mubr.f32.gmra.mrb[0].mxu0 %v75
    %v268 = vpop.f32.mrb[0].mxu0
    %v269 = vadd.f32 0.0, %v268
    %v270 = vpop.f32.mrb[0].mxu0
    %271 = vmatprep.mubr.f32.mxu0 0.0
    %272 = vmatmul.mubr.f32.gmra.mrb[0].mxu0 %v76
    %v273 = vpop.f32.mrb[0].mxu0
    %v274 = vadd.f32 0.0, %v273
    %v275 = vpop.f32.mrb[0].mxu0
    %276 = vdwg.mxu0
    %v277 = vadd.f32 %v69, %v192
    %v278 = vadd.f32 %v70, %v194
    %v279 = vadd.f32 %v71, %v269
    %v280 = vadd.f32 %v72, %v198
    %v281 = vadd.f32 %v73, %v200
    %v282 = vadd.f32 %v74, %v274
    %283 = vst [vmem:[#allocation2] sm:$0xff] %v277
    %284 = vst [vmem:[#allocation2 + $0x8] sm:$0xff] %v278
    %285 = vst [vmem:[#allocation2 + $0x10] sm:$0xff] %v279
    %286 = vst [vmem:[#allocation2 + $0x18] sm:$0xff] %v280
    %287 = vst [vmem:[#allocation2 + $0x20] sm:$0xff] %v281
    %288 = vst [vmem:[#allocation2 + $0x28] sm:$0xff] %v282
    // Predicated region
    $region34: #{tpu_custom_call.1} parent=1 // pred_check
      %p289 = pneg %p59
    $region35: #{tpu_custom_call.1} parent=1 // pred_check_branch
      %291 = sbr.rel (%p289) target = $region37
    $region36: #{tpu_custom_call.1} parent=1 // pred_region
      %v292 = vld [vmem:[#allocation2] sm:$0xff]
      %v293 = vld [vmem:[#allocation2 + $0x8] sm:$0xff]
      %v294 = vld [vmem:[#allocation2 + $0x10] sm:$0xff]
      %v295 = vld [vmem:[#allocation2 + $0x18] sm:$0xff]
      %v296 = vld [vmem:[#allocation2 + $0x20] sm:$0xff]
      %v297 = vld [vmem:[#allocation2 + $0x28] sm:$0xff]
      %v298 = vld [vmem:[%s2] sm:$0x7]
      %v300 = vlaneseq
      %v301 = vshrl.u32 %v300, 7
      %v302 = vsub.s32 0, %v301
      %v303 = vrot.slane %v298, %v302
      %v304 = vlaneseq
      %v305 = vshrl.u32 %v304, 7
      %v306 = vsub.s32 1, %v305
      %v307 = vrot.slane %v298, %v306
      %v308 = vlaneseq
      %v309 = vshrl.u32 %v308, 7
      %v310 = vsub.s32 2, %v309
      %v311 = vrot.slane %v298, %v310
      %v315 = vadd.f32 %v292, %v303
      %v316 = vadd.f32 %v293, %v307
      %v317 = vadd.f32 %v294, %v311
      %v318 = vadd.f32 %v295, %v303
      %v319 = vadd.f32 %v296, %v307
      %v320 = vadd.f32 %v297, %v311
      %v321 = vld [vmem:[#allocation8] sm:$0xff]
      %v322 = vld [vmem:[#allocation8 + $0x8] sm:$0xff]
      %v323 = vand.u32 2147483647, %v321
      %vm324 = vcmp.le.f32.partialorder %v323, 0.7853982
      %vm325 = vcmp.lt.s32.totalorder %v321, 0
      %v326 = vand.u32 %v321, 2139095040
      %v327 = vshrl.u32 %v326, 23
      %v328 = vsub.s32 %v327, 127
      %v329 = vand.u32 2147483647, %v321
      %v330 = vand.u32 %v329, 8388607
      %v331 = vor.u32 %v330, 8388608
      %v332 = vsub.s32 0, %v331
      %v333 = vadd.s32 %v328, 1
      %vm334 = vcmp.gt.s32.totalorder %v333, 0
      %v335 = vsel %vm334, %v333, 0
      %v336 = vshrl.u32 %v335, 5
      %v337 = vand.u32 %v335, 31
      %v338 = vsub.s32 32, %v337
      %v339 = vshrl.u32 683565275, %v338
      %v340 = vshll.u32 683565275, %v337
      %v341 = vshrl.u32 2475754826, %v338
      %v342 = vor.u32 %v340, %v341
      %v343 = vshll.u32 2475754826, %v337
      %v344 = vshrl.u32 2131351028, %v338
      %v345 = vor.u32 %v343, %v344
      %v346 = vshll.u32 2131351028, %v337
      %v347 = vshrl.u32 2102212464, %v338
      %v348 = vor.u32 %v346, %v347
      %v349 = vshll.u32 2102212464, %v337
      %v350 = vshrl.u32 920167782, %v338
      %v351 = vor.u32 %v349, %v350
      %v352 = vshll.u32 920167782, %v337
      %v353 = vshrl.u32 1326507024, %v338
      %v354 = vor.u32 %v352, %v353
      %vm355 = vcmp.lt.s32.totalorder %v336, 1
      %vm356 = vcmp.lt.s32.totalorder %v336, 2
      %vm357 = vcmp.lt.s32.totalorder %v336, 3
      %vm358 = vcmp.lt.s32.totalorder %v336, 4
      %v359 = vsel %vm355, %v339, %v342
      %v360 = vsel %vm358, %v348, 2102212464
      %v361 = vsel %vm357, %v345, %v360
      %v362 = vsel %vm356, %v359, %v361
      %v363 = vsel %vm355, %v342, %v345
      %v364 = vsel %vm358, %v351, 920167782
      %v365 = vsel %vm357, %v348, %v364
      %v366 = vsel %vm356, %v363, %v365
      %v367 = vsel %vm355, %v345, %v348
      %v368 = vsel %vm358, %v354, 1326507024
      %v369 = vsel %vm357, %v351, %v368
      %v370 = vsel %vm356, %v367, %v369
      %v371 = vshll.u32 %v331, 8
      %v372 = vmul.u32.u64.compose %v371, %v370
      %v373 = vextract.low.u32 %v372
      %v374 = vextract.high.u32 %v372
      %v375 = vmul.u32.u64.compose %v371, %v366
      %v376 = vextract.low.u32 %v375
      %v377 = vextract.high.u32 %v375
      %v378 = vmul.u32 %v371, %v362
      %v379 = vadd.s32 %v374, %v376
      %vm380 = vc.u32 %v374, %v376
      %v381 = vadd.s32 %v377, 1
      %v382 = vsel %vm380, %v381, %v377
      %v383 = vadd.s32 %v378, %v382
      %v384 = vadd.s32 %v383, 536870912
      %v385 = vshrl.u32 %v384, 30
      %v386 = vshll.u32 %v385, 30
      %v387 = vsub.s32 %v383, %v386
      %vm388 = vcmp.lt.s32.totalorder %v387, 0
      %v389 = vsub.s32 0, %v387
      %v390 = vsel %vm388, %v389, %v387
      %v391 = vclz %v390
      %v392 = vsub.s32 %v391, 2
      %vm393 = vcmp.gt.s32.totalorder 0, %v392
      %v394 = vsel %vm393, 0, %v392
      %v395 = vsub.s32 32, %v394
      %v396 = vshll.u32 %v387, %v394
      %v397 = vshrl.u32 %v379, %v395
      %v398 = vor.u32 %v396, %v397
      %v399 = vsub.s32 4294967266, %v394
      %v400 = vadd.s32 %v399, 127
      %v401 = vshll.u32 %v400, 23
      %v402 = vor.u32 4788187, %v401
      %v403 = vand.u32 2147483647, %v402
      %v405 = vcvt.s32.f32 %v398
      %v406 = vmul.f32 %v405, %v403
      %v407 = vxor.u32 %v406, 2147483648
      %v408 = vsel %vm325, %v407, %v406
      %v409 = vsub.s32 4, %v385
      %v410 = vsel %vm325, %v409, %v385
      %v411 = vsel %vm324, %v321, %v408
      %v412 = vsel %vm324, 0, %v410
      %v413 = vcosq.f32.pop %v411
      %v414 = vsinq.f32.pop %v411
      %vm415 = vweird.f32 %v321
      %v416 = vand.u32 %v412, 3
      %vm417 = vcmp.lt.s32.totalorder %v416, 2
      %vm418 = vcmp.eq.s32.totalorder %v416, 0
      %v419 = vxor.u32 %v414, 2147483648
      %v420 = vsel %vm418, %v413, %v419
      %vm421 = vcmp.eq.s32.totalorder %v416, 2
      %v422 = vxor.u32 %v413, 2147483648
      %v423 = vsel %vm421, %v422, %v414
      %v424 = vsel %vm417, %v420, %v423
      %v425 = vsel %vm415, nan, %v424
      %v426 = vand.u32 2147483647, %v322
      %vm427 = vcmp.le.f32.partialorder %v426, 0.7853982
      %vm428 = vcmp.lt.s32.totalorder %v322, 0
      %v429 = vand.u32 %v322, 2139095040
      %v430 = vshrl.u32 %v429, 23
      %v431 = vsub.s32 %v430, 127
      %v432 = vand.u32 2147483647, %v322
      %v433 = vand.u32 %v432, 8388607
      %v434 = vor.u32 %v433, 8388608
      %v435 = vsub.s32 0, %v434
      %v436 = vadd.s32 %v431, 1
      %vm437 = vcmp.gt.s32.totalorder %v436, 0
      %v438 = vsel %vm437, %v436, 0
      %v439 = vshrl.u32 %v438, 5
      %v440 = vand.u32 %v438, 31
      %v441 = vsub.s32 32, %v440
      %v442 = vshrl.u32 683565275, %v441
      %v443 = vshll.u32 683565275, %v440
      %v444 = vshrl.u32 2475754826, %v441
      %v445 = vor.u32 %v443, %v444
      %v446 = vshll.u32 2475754826, %v440
      %v447 = vshrl.u32 2131351028, %v441
      %v448 = vor.u32 %v446, %v447
      %v449 = vshll.u32 2131351028, %v440
      %v450 = vshrl.u32 2102212464, %v441
      %v451 = vor.u32 %v449, %v450
      %v452 = vshll.u32 2102212464, %v440
      %v453 = vshrl.u32 920167782, %v441
      %v454 = vor.u32 %v452, %v453
      %v455 = vshll.u32 920167782, %v440
      %v456 = vshrl.u32 1326507024, %v441
      %v457 = vor.u32 %v455, %v456
      %vm458 = vcmp.lt.s32.totalorder %v439, 1
      %vm459 = vcmp.lt.s32.totalorder %v439, 2
      %vm460 = vcmp.lt.s32.totalorder %v439, 3
      %vm461 = vcmp.lt.s32.totalorder %v439, 4
      %v462 = vsel %vm458, %v442, %v445
      %v463 = vsel %vm461, %v451, 2102212464
      %v464 = vsel %vm460, %v448, %v463
      %v465 = vsel %vm459, %v462, %v464
      %v466 = vsel %vm458, %v445, %v448
      %v467 = vsel %vm461, %v454, 920167782
      %v468 = vsel %vm460, %v451, %v467
      %v469 = vsel %vm459, %v466, %v468
      %v470 = vsel %vm458, %v448, %v451
      %v471 = vsel %vm461, %v457, 1326507024
      %v472 = vsel %vm460, %v454, %v471
      %v473 = vsel %vm459, %v470, %v472
      %v474 = vshll.u32 %v434, 8
      %v475 = vmul.u32.u64.compose %v474, %v473
      %v476 = vextract.low.u32 %v475
      %v477 = vextract.high.u32 %v475
      %v478 = vmul.u32.u64.compose %v474, %v469
      %v479 = vextract.low.u32 %v478
      %v480 = vextract.high.u32 %v478
      %v481 = vmul.u32 %v474, %v465
      %v482 = vadd.s32 %v477, %v479
      %vm483 = vc.u32 %v477, %v479
      %v484 = vadd.s32 %v480, 1
      %v485 = vsel %vm483, %v484, %v480
      %v486 = vadd.s32 %v481, %v485
      %v487 = vadd.s32 %v486, 536870912
      %v488 = vshrl.u32 %v487, 30
      %v489 = vshll.u32 %v488, 30
      %v490 = vsub.s32 %v486, %v489
      %vm491 = vcmp.lt.s32.totalorder %v490, 0
      %v492 = vsub.s32 0, %v490
      %v493 = vsel %vm491, %v492, %v490
      %v494 = vclz %v493
      %v495 = vsub.s32 %v494, 2
      %vm496 = vcmp.gt.s32.totalorder 0, %v495
      %v497 = vsel %vm496, 0, %v495
      %v498 = vsub.s32 32, %v497
      %v499 = vshll.u32 %v490, %v497
      %v500 = vshrl.u32 %v482, %v498
      %v501 = vor.u32 %v499, %v500
      %v502 = vsub.s32 4294967266, %v497
      %v503 = vadd.s32 %v502, 127
      %v504 = vshll.u32 %v503, 23
      %v505 = vor.u32 4788187, %v504
      %v506 = vand.u32 2147483647, %v505
      %v508 = vcvt.s32.f32 %v501
      %v509 = vmul.f32 %v508, %v506
      %v510 = vxor.u32 %v509, 2147483648
      %v511 = vsel %vm428, %v510, %v509
      %v512 = vsub.s32 4, %v488
      %v513 = vsel %vm428, %v512, %v488
      %v514 = vsel %vm427, %v322, %v511
      %v515 = vsel %vm427, 0, %v513
      %v516 = vcosq.f32.pop %v514
      %v517 = vsinq.f32.pop %v514
      %vm518 = vweird.f32 %v322
      %v519 = vand.u32 %v515, 3
      %vm520 = vcmp.lt.s32.totalorder %v519, 2
      %vm521 = vcmp.eq.s32.totalorder %v519, 0
      %v522 = vxor.u32 %v517, 2147483648
      %v523 = vsel %vm521, %v516, %v522
      %vm524 = vcmp.eq.s32.totalorder %v519, 2
      %v525 = vxor.u32 %v516, 2147483648
      %v526 = vsel %vm524, %v525, %v517
      %v527 = vsel %vm520, %v523, %v526
      %v528 = vsel %vm518, nan, %v527
      %v529 = vand.u32 2147483647, %v321
      %vm530 = vcmp.le.f32.partialorder %v529, 0.7853982
      %vm531 = vcmp.lt.s32.totalorder %v321, 0
      %v532 = vand.u32 %v321, 2139095040
      %v533 = vshrl.u32 %v532, 23
      %v534 = vsub.s32 %v533, 127
      %v535 = vand.u32 2147483647, %v321
      %v536 = vand.u32 %v535, 8388607
      %v537 = vor.u32 %v536, 8388608
      %v538 = vsub.s32 0, %v537
      %v539 = vadd.s32 %v534, 1
      %vm540 = vcmp.gt.s32.totalorder %v539, 0
      %v541 = vsel %vm540, %v539, 0
      %v542 = vshrl.u32 %v541, 5
      %v543 = vand.u32 %v541, 31
      %v544 = vsub.s32 32, %v543
      %v545 = vshrl.u32 683565275, %v544
      %v546 = vshll.u32 683565275, %v543
      %v547 = vshrl.u32 2475754826, %v544
      %v548 = vor.u32 %v546, %v547
      %v549 = vshll.u32 2475754826, %v543
      %v550 = vshrl.u32 2131351028, %v544
      %v551 = vor.u32 %v549, %v550
      %v552 = vshll.u32 2131351028, %v543
      %v553 = vshrl.u32 2102212464, %v544
      %v554 = vor.u32 %v552, %v553
      %v555 = vshll.u32 2102212464, %v543
      %v556 = vshrl.u32 920167782, %v544
      %v557 = vor.u32 %v555, %v556
      %v558 = vshll.u32 920167782, %v543
      %v559 = vshrl.u32 1326507024, %v544
      %v560 = vor.u32 %v558, %v559
      %vm561 = vcmp.lt.s32.totalorder %v542, 1
      %vm562 = vcmp.lt.s32.totalorder %v542, 2
      %vm563 = vcmp.lt.s32.totalorder %v542, 3
      %vm564 = vcmp.lt.s32.totalorder %v542, 4
      %v565 = vsel %vm561, %v545, %v548
      %v566 = vsel %vm564, %v554, 2102212464
      %v567 = vsel %vm563, %v551, %v566
      %v568 = vsel %vm562, %v565, %v567
      %v569 = vsel %vm561, %v548, %v551
      %v570 = vsel %vm564, %v557, 920167782
      %v571 = vsel %vm563, %v554, %v570
      %v572 = vsel %vm562, %v569, %v571
      %v573 = vsel %vm561, %v551, %v554
      %v574 = vsel %vm564, %v560, 1326507024
      %v575 = vsel %vm563, %v557, %v574
      %v576 = vsel %vm562, %v573, %v575
      %v577 = vshll.u32 %v537, 8
      %v578 = vmul.u32.u64.compose %v577, %v576
      %v579 = vextract.low.u32 %v578
      %v580 = vextract.high.u32 %v578
      %v581 = vmul.u32.u64.compose %v577, %v572
      %v582 = vextract.low.u32 %v581
      %v583 = vextract.high.u32 %v581
      %v584 = vmul.u32 %v577, %v568
      %v585 = vadd.s32 %v580, %v582
      %vm586 = vc.u32 %v580, %v582
      %v587 = vadd.s32 %v583, 1
      %v588 = vsel %vm586, %v587, %v583
      %v589 = vadd.s32 %v584, %v588
      %v590 = vadd.s32 %v589, 536870912
      %v591 = vshrl.u32 %v590, 30
      %v592 = vshll.u32 %v591, 30
      %v593 = vsub.s32 %v589, %v592
      %vm594 = vcmp.lt.s32.totalorder %v593, 0
      %v595 = vsub.s32 0, %v593
      %v596 = vsel %vm594, %v595, %v593
      %v597 = vclz %v596
      %v598 = vsub.s32 %v597, 2
      %vm599 = vcmp.gt.s32.totalorder 0, %v598
      %v600 = vsel %vm599, 0, %v598
      %v601 = vsub.s32 32, %v600
      %v602 = vshll.u32 %v593, %v600
      %v603 = vshrl.u32 %v585, %v601
      %v604 = vor.u32 %v602, %v603
      %v605 = vsub.s32 4294967266, %v600
      %v606 = vadd.s32 %v605, 127
      %v607 = vshll.u32 %v606, 23
      %v608 = vor.u32 4788187, %v607
      %v609 = vand.u32 2147483647, %v608
      %v611 = vcvt.s32.f32 %v604
      %v612 = vmul.f32 %v611, %v609
      %v613 = vxor.u32 %v612, 2147483648
      %v614 = vsel %vm531, %v613, %v612
      %v615 = vsub.s32 4, %v591
      %v616 = vsel %vm531, %v615, %v591
      %v617 = vsel %vm530, %v321, %v614
      %v618 = vsel %vm530, 0, %v616
      %v619 = vcosq.f32.pop %v617
      %v620 = vsinq.f32.pop %v617
      %vm621 = vweird.f32 %v321
      %v622 = vadd.s32 %v618, 3
      %v623 = vand.u32 %v622, 3
      %vm624 = vcmp.lt.s32.totalorder %v623, 2
      %vm625 = vcmp.eq.s32.totalorder %v623, 0
      %v626 = vxor.u32 %v620, 2147483648
      %v627 = vsel %vm625, %v619, %v626
      %vm628 = vcmp.eq.s32.totalorder %v623, 2
      %v629 = vxor.u32 %v619, 2147483648
      %v630 = vsel %vm628, %v629, %v620
      %v631 = vsel %vm624, %v627, %v630
      %v632 = vsel %vm621, nan, %v631
      %v633 = vand.u32 2147483647, %v322
      %vm634 = vcmp.le.f32.partialorder %v633, 0.7853982
      %vm635 = vcmp.lt.s32.totalorder %v322, 0
      %v636 = vand.u32 %v322, 2139095040
      %v637 = vshrl.u32 %v636, 23
      %v638 = vsub.s32 %v637, 127
      %v639 = vand.u32 2147483647, %v322
      %v640 = vand.u32 %v639, 8388607
      %v641 = vor.u32 %v640, 8388608
      %v642 = vsub.s32 0, %v641
      %v643 = vadd.s32 %v638, 1
      %vm644 = vcmp.gt.s32.totalorder %v643, 0
      %v645 = vsel %vm644, %v643, 0
      %v646 = vshrl.u32 %v645, 5
      %v647 = vand.u32 %v645, 31
      %v648 = vsub.s32 32, %v647
      %v649 = vshrl.u32 683565275, %v648
      %v650 = vshll.u32 683565275, %v647
      %v651 = vshrl.u32 2475754826, %v648
      %v652 = vor.u32 %v650, %v651
      %v653 = vshll.u32 2475754826, %v647
      %v654 = vshrl.u32 2131351028, %v648
      %v655 = vor.u32 %v653, %v654
      %v656 = vshll.u32 2131351028, %v647
      %v657 = vshrl.u32 2102212464, %v648
      %v658 = vor.u32 %v656, %v657
      %v659 = vshll.u32 2102212464, %v647
      %v660 = vshrl.u32 920167782, %v648
      %v661 = vor.u32 %v659, %v660
      %v662 = vshll.u32 920167782, %v647
      %v663 = vshrl.u32 1326507024, %v648
      %v664 = vor.u32 %v662, %v663
      %vm665 = vcmp.lt.s32.totalorder %v646, 1
      %vm666 = vcmp.lt.s32.totalorder %v646, 2
      %vm667 = vcmp.lt.s32.totalorder %v646, 3
      %vm668 = vcmp.lt.s32.totalorder %v646, 4
      %v669 = vsel %vm665, %v649, %v652
      %v670 = vsel %vm668, %v658, 2102212464
      %v671 = vsel %vm667, %v655, %v670
      %v672 = vsel %vm666, %v669, %v671
      %v673 = vsel %vm665, %v652, %v655
      %v674 = vsel %vm668, %v661, 920167782
      %v675 = vsel %vm667, %v658, %v674
      %v676 = vsel %vm666, %v673, %v675
      %v677 = vsel %vm665, %v655, %v658
      %v678 = vsel %vm668, %v664, 1326507024
      %v679 = vsel %vm667, %v661, %v678
      %v680 = vsel %vm666, %v677, %v679
      %v681 = vshll.u32 %v641, 8
      %v682 = vmul.u32.u64.compose %v681, %v680
      %v683 = vextract.low.u32 %v682
      %v684 = vextract.high.u32 %v682
      %v685 = vmul.u32.u64.compose %v681, %v676
      %v686 = vextract.low.u32 %v685
      %v687 = vextract.high.u32 %v685
      %v688 = vmul.u32 %v681, %v672
      %v689 = vadd.s32 %v684, %v686
      %vm690 = vc.u32 %v684, %v686
      %v691 = vadd.s32 %v687, 1
      %v692 = vsel %vm690, %v691, %v687
      %v693 = vadd.s32 %v688, %v692
      %v694 = vadd.s32 %v693, 536870912
      %v695 = vshrl.u32 %v694, 30
      %v696 = vshll.u32 %v695, 30
      %v697 = vsub.s32 %v693, %v696
      %vm698 = vcmp.lt.s32.totalorder %v697, 0
      %v699 = vsub.s32 0, %v697
      %v700 = vsel %vm698, %v699, %v697
      %v701 = vclz %v700
      %v702 = vsub.s32 %v701, 2
      %vm703 = vcmp.gt.s32.totalorder 0, %v702
      %v704 = vsel %vm703, 0, %v702
      %v705 = vsub.s32 32, %v704
      %v706 = vshll.u32 %v697, %v704
      %v707 = vshrl.u32 %v689, %v705
      %v708 = vor.u32 %v706, %v707
      %v709 = vsub.s32 4294967266, %v704
      %v710 = vadd.s32 %v709, 127
      %v711 = vshll.u32 %v710, 23
      %v712 = vor.u32 4788187, %v711
      %v713 = vand.u32 2147483647, %v712
      %v715 = vcvt.s32.f32 %v708
      %v716 = vmul.f32 %v715, %v713
      %v717 = vxor.u32 %v716, 2147483648
      %v718 = vsel %vm635, %v717, %v716
      %v719 = vsub.s32 4, %v695
      %v720 = vsel %vm635, %v719, %v695
      %v721 = vsel %vm634, %v322, %v718
      %v722 = vsel %vm634, 0, %v720
      %v723 = vcosq.f32.pop %v721
      %v724 = vsinq.f32.pop %v721
      %vm725 = vweird.f32 %v322
      %v726 = vadd.s32 %v722, 3
      %v727 = vand.u32 %v726, 3
      %vm728 = vcmp.lt.s32.totalorder %v727, 2
      %vm729 = vcmp.eq.s32.totalorder %v727, 0
      %v730 = vxor.u32 %v724, 2147483648
      %v731 = vsel %vm729, %v723, %v730
      %vm732 = vcmp.eq.s32.totalorder %v727, 2
      %v733 = vxor.u32 %v723, 2147483648
      %v734 = vsel %vm732, %v733, %v724
      %v735 = vsel %vm728, %v731, %v734
      %v736 = vsel %vm725, nan, %v735
      %v737 = vmul.f32 %v315, %v425
      %v738 = vmul.f32 %v318, %v528
      %v739 = vsub.f32 0.0, %v315
      %v740 = vsub.f32 0.0, %v318
      %743 = vrot.lane.b32.xlu0 %v739, 112
      %v744 = vpop.permute.xlu0 %743
      %745 = vrot.lane.b32.xlu0 %v740, 112
      %v746 = vpop.permute.xlu0 %745
      %751 = vrot.lane.b32.xlu0 %v315, 16
      %v752 = vpop.permute.xlu0 %751
      %753 = vrot.lane.b32.xlu0 %v318, 16
      %v754 = vpop.permute.xlu0 %753
      %vm757 = vcmask 130048
      %v758 = vsel %vm757, %v744, %v752
      %v759 = vsel %vm757, %v746, %v754
      %760 = vrot.lane.b32.xlu0 %v739, 80
      %v761 = vpop.permute.xlu0 %760
      %762 = vrot.lane.b32.xlu0 %v740, 80
      %v763 = vpop.permute.xlu0 %762
      %766 = vrot.lane.b32.xlu0 %v315, 112
      %v767 = vpop.permute.xlu0 %766
      %768 = vrot.lane.b32.xlu0 %v318, 112
      %v769 = vpop.permute.xlu0 %768
      %v772 = vsel %vm757, %v761, %v767
      %v773 = vsel %vm757, %v763, %v769
      %774 = vrot.lane.b32.xlu0 %v739, 48
      %v775 = vpop.permute.xlu0 %774
      %776 = vrot.lane.b32.xlu0 %v740, 48
      %v777 = vpop.permute.xlu0 %776
      %780 = vrot.lane.b32.xlu0 %v315, 80
      %v781 = vpop.permute.xlu0 %780
      %782 = vrot.lane.b32.xlu0 %v318, 80
      %v783 = vpop.permute.xlu0 %782
      %v786 = vsel %vm757, %v775, %v781
      %v787 = vsel %vm757, %v777, %v783
      %788 = vrot.lane.b32.xlu0 %v739, 16
      %v789 = vpop.permute.xlu0 %788
      %790 = vrot.lane.b32.xlu0 %v740, 16
      %v791 = vpop.permute.xlu0 %790
      %794 = vrot.lane.b32.xlu0 %v315, 48
      %v795 = vpop.permute.xlu0 %794
      %796 = vrot.lane.b32.xlu0 %v318, 48
      %v797 = vpop.permute.xlu0 %796
      %v800 = vsel %vm757, %v789, %v795
      %v801 = vsel %vm757, %v791, %v797
      %804 = vrot.lane.b32.xlu0 %v772, 32
      %v805 = vpop.permute.xlu0 %804
      %806 = vrot.lane.b32.xlu0 %v773, 32
      %v807 = vpop.permute.xlu0 %806
      %812 = vrot.lane.b32.xlu0 %v786, 64
      %v813 = vpop.permute.xlu0 %812
      %814 = vrot.lane.b32.xlu0 %v787, 64
      %v815 = vpop.permute.xlu0 %814
      %820 = vrot.lane.b32.xlu0 %v800, 96
      %v821 = vpop.permute.xlu0 %820
      %822 = vrot.lane.b32.xlu0 %v801, 96
      %v823 = vpop.permute.xlu0 %822
      %vm826 = vcmask 261120
      %v827 = vsel %vm826, %v758, %v805
      %v828 = vsel %vm826, %v759, %v807
      %vm829 = vcmask 523264
      %v830 = vsel %vm829, %v827, %v813
      %v831 = vsel %vm829, %v828, %v815
      %vm832 = vcmask 785408
      %v833 = vsel %vm832, %v830, %v821
      %v834 = vsel %vm832, %v831, %v823
      %v835 = vmul.f32 %v833, %v632
      %v836 = vmul.f32 %v834, %v736
      %v837 = vadd.f32 %v737, %v835
      %v838 = vadd.f32 %v738, %v836
      %v839 = vmul.f32 %v837, 0.17677669
      %v840 = vmul.f32 %v838, 0.17677669
      %v841 = vmul.f32 %v316, %v425
      %v842 = vmul.f32 %v319, %v528
      %v843 = vsub.f32 0.0, %v316
      %v844 = vsub.f32 0.0, %v319
      %847 = vrot.lane.b32.xlu0 %v843, 112
      %v848 = vpop.permute.xlu0 %847
      %849 = vrot.lane.b32.xlu0 %v844, 112
      %v850 = vpop.permute.xlu0 %849
      %855 = vrot.lane.b32.xlu0 %v316, 16
      %v856 = vpop.permute.xlu0 %855
      %857 = vrot.lane.b32.xlu0 %v319, 16
      %v858 = vpop.permute.xlu0 %857
      %v861 = vsel %vm757, %v848, %v856
      %v862 = vsel %vm757, %v850, %v858
      %863 = vrot.lane.b32.xlu0 %v843, 80
      %v864 = vpop.permute.xlu0 %863
      %865 = vrot.lane.b32.xlu0 %v844, 80
      %v866 = vpop.permute.xlu0 %865
      %869 = vrot.lane.b32.xlu0 %v316, 112
      %v870 = vpop.permute.xlu0 %869
      %871 = vrot.lane.b32.xlu0 %v319, 112
      %v872 = vpop.permute.xlu0 %871
      %v875 = vsel %vm757, %v864, %v870
      %v876 = vsel %vm757, %v866, %v872
      %877 = vrot.lane.b32.xlu0 %v843, 48
      %v878 = vpop.permute.xlu0 %877
      %879 = vrot.lane.b32.xlu0 %v844, 48
      %v880 = vpop.permute.xlu0 %879
      %883 = vrot.lane.b32.xlu0 %v316, 80
      %v884 = vpop.permute.xlu0 %883
      %885 = vrot.lane.b32.xlu0 %v319, 80
      %v886 = vpop.permute.xlu0 %885
      %v889 = vsel %vm757, %v878, %v884
      %v890 = vsel %vm757, %v880, %v886
      %891 = vrot.lane.b32.xlu0 %v843, 16
      %v892 = vpop.permute.xlu0 %891
      %893 = vrot.lane.b32.xlu0 %v844, 16
      %v894 = vpop.permute.xlu0 %893
      %897 = vrot.lane.b32.xlu0 %v316, 48
      %v898 = vpop.permute.xlu0 %897
      %899 = vrot.lane.b32.xlu0 %v319, 48
      %v900 = vpop.permute.xlu0 %899
      %v903 = vsel %vm757, %v892, %v898
      %v904 = vsel %vm757, %v894, %v900
      %907 = vrot.lane.b32.xlu0 %v875, 32
      %v908 = vpop.permute.xlu0 %907
      %909 = vrot.lane.b32.xlu0 %v876, 32
      %v910 = vpop.permute.xlu0 %909
      %915 = vrot.lane.b32.xlu0 %v889, 64
      %v916 = vpop.permute.xlu0 %915
      %917 = vrot.lane.b32.xlu0 %v890, 64
      %v918 = vpop.permute.xlu0 %917
      %923 = vrot.lane.b32.xlu0 %v903, 96
      %v924 = vpop.permute.xlu0 %923
      %925 = vrot.lane.b32.xlu0 %v904, 96
      %v926 = vpop.permute.xlu0 %925
      %v929 = vsel %vm826, %v861, %v908
      %v930 = vsel %vm826, %v862, %v910
      %v931 = vsel %vm829, %v929, %v916
      %v932 = vsel %vm829, %v930, %v918
      %v933 = vsel %vm832, %v931, %v924
      %v934 = vsel %vm832, %v932, %v926
      %v935 = vmul.f32 %v933, %v632
      %v936 = vmul.f32 %v934, %v736
      %v937 = vadd.f32 %v841, %v935
      %v938 = vadd.f32 %v842, %v936
      %939 = vst [vmem:[#allocation9] sm:$0xff] %v839
      %940 = vst [vmem:[#allocation9 + $0x8] sm:$0xff] %v937
      %941 = vst [vmem:[#allocation9 + $0x10] sm:$0xff] %v317
      %942 = vst [vmem:[#allocation9 + $0x18] sm:$0xff] %v840
      %943 = vst [vmem:[#allocation9 + $0x20] sm:$0xff] %v938
      %944 = vst [vmem:[#allocation9 + $0x28] sm:$0xff] %v320
    $region37: #{tpu_custom_call.1} parent=1 // pred_fallthru
      _
    // Predicated region
    $region38: #{tpu_custom_call.1} parent=1 // pred_check
      _
    $region39: #{tpu_custom_call.1} parent=1 // pred_check_branch
      %946 = sbr.rel (0) target = $region41
    $region40: #{tpu_custom_call.1} parent=1 // pred_region
      %s948 = ssub.s32 768, 768
      %949 = vsyncadd [#allocation5], %s948
      %s950 = sshll.u32 [#allocation9], 4
      %s951 = int_to_ptr.vmem [resolvable:$true] %s950
      %956 = dma.vmem_to_hbm [thread:$0]  %s951, 768, %s4, [#allocation5], 384, 384, 24
    $region41: #{tpu_custom_call.1} parent=1 // pred_fallthru
      _
    // Predicated region
    $region42: #{tpu_custom_call.1} parent=1 // pred_check
      _
    $region43: #{tpu_custom_call.1} parent=1 // pred_check_branch
      %958 = sbr.rel (0) target = $region45
    $region44: #{tpu_custom_call.1} parent=1 // pred_region
      %959 = dma.done [#allocation5], 768
    $region45: #{tpu_custom_call.1} parent=1 // pred_fallthru
      _
    %960 = vsyncpa [#allocation4], 1
    %961 = vsyncpa [#allocation7], 1
    %962 = vsyncpa [#allocation5], 1

</llo_original>
